<compile_context>
chip_gen: v7x
topology: tpu7x:2x2x1
jax: 0.10.0
libtpu: 0.0.40
codegen_flags: <defaults>
</compile_context>

<pallas_src>
import functools

import jax
import jax.numpy as jnp
from jax.experimental import pallas as pl
from jax.experimental.pallas import tpu as pltpu


def _g_loss_kernel(n_rows, out_ref, y_ref, r_ref, loss_ref, acc_ref):
    p = pl.program_id(0)           # core-split axis ("parallel")
    i = pl.program_id(1)           # reduction axis  ("arbitrary")
    steps = pl.num_programs(1)

    tm, V = out_ref.shape

    # Zero the per-row accumulator at the start of each split's reduction.
    @pl.when(i == 0)
    def _():
        acc_ref[...] = jnp.zeros_like(acc_ref)

    # Logits tile: loaded in native dtype, cast to f32 in-register.
    logits = out_ref[...].astype(jnp.float32)                    # (tm, V)
    y = y_ref[...]                                                # (tm, 1) int32
    r = r_ref[...].astype(jnp.float32)                            # (tm, 1)

    # Numerically-stable log-softmax pieces over the vocab (lane) axis.
    m = jnp.max(logits, axis=-1, keepdims=True)                   # (tm, 1)
    shifted = logits - m                                          # (tm, V)
    lse = jnp.log(jnp.sum(jnp.exp(shifted), axis=-1, keepdims=True))

    # Target-column gather via where-select (no one-hot convert + multiply).
    col = jax.lax.broadcasted_iota(jnp.int32, (tm, V), 1)
    t = jnp.sum(jnp.where(col == y, shifted, 0.0),
                axis=-1, keepdims=True)                           # (tm, 1)
    log_p_hat = t - lse                                           # (tm, 1)

    # Mask rows past N (partial last tile or clamped duplicate tiles).  Select,
    # not multiply-by-zero, so garbage rows (possibly NaN/Inf) contribute 0.
    blk = p * steps + i                                           # unclamped tile idx
    row = jax.lax.broadcasted_iota(jnp.int32, (tm, 1), 0)
    global_row = blk * tm + row
    contrib = jnp.where(global_row < n_rows, log_p_hat * r, 0.0)

    # Per-row accumulation; scalar reduce deferred to the last step.
    acc_ref[...] += contrib

    @pl.when(i == steps - 1)
    def _():
        loss_ref[...] = jnp.sum(acc_ref[...]).reshape(1, 1, 1)


def _tpu_generation_defaults():
    kind = ""
    try:
        kind = jax.devices()[0].device_kind.lower()
    except Exception:
        pass
    if "v7" in kind:
        # 64 MiB VMEM / TensorCore, 2 TCs per chip: modest tiles, split rows
        # across cores via the "parallel" leading grid axis.
        return dict(num_core_splits=2,
                    logits_vmem_budget_bytes=16 * 1024 * 1024,
                    vmem_limit_bytes=48 * 1024 * 1024)
    if "v5" in kind or "v6" in kind:
        # 128 MiB VMEM, single TC: big tiles, raise the scoped limit.
        return dict(num_core_splits=1,
                    logits_vmem_budget_bytes=40 * 1024 * 1024,
                    vmem_limit_bytes=64 * 1024 * 1024)
    # Unknown / fallback: conservative everywhere.
    return dict(num_core_splits=1,
                logits_vmem_budget_bytes=12 * 1024 * 1024,
                vmem_limit_bytes=32 * 1024 * 1024)


def g_loss(out, y, rewards, *, num_core_splits=None,
           logits_vmem_budget_bytes=None, vmem_limit_bytes=None,
           row_tile=None):
    """out: (B, T, V) float, y: (B, T) int, rewards: (B, T) float -> scalar."""
    B, T, V = out.shape
    N = B * T
    itemsize = jnp.dtype(out.dtype).itemsize

    d = _tpu_generation_defaults()
    P = num_core_splits if num_core_splits is not None else d["num_core_splits"]
    budget = (logits_vmem_budget_bytes if logits_vmem_budget_bytes is not None
              else d["logits_vmem_budget_bytes"])
    vmem_limit = (vmem_limit_bytes if vmem_limit_bytes is not None
                  else d["vmem_limit_bytes"])
    P = max(1, min(P, -(-N // 8)))          # don't over-split tiny inputs

    # Row tile: largest multiple of 8 whose double-buffered logits + (tm,128)-
    # padded y/r blocks fit the budget, capped at 512 rows and at the
    # per-split row count.
    # TODO(synk): for very large vocab (32K+), add a vocab grid axis with an
    # online logsumexp accumulator instead of one (tm, V) block per row tile.
    per_row_bytes = V * itemsize + 2 * 128 * 4        # logits + y + r (lane-padded)
    tm_cap = (budget // (2 * per_row_bytes)) // 8 * 8
    tm_cap = max(8, min(512, tm_cap))
    rows_per_split = -(-N // P)
    tm = min(tm_cap, -(-rows_per_split // 8) * 8)
    if row_tile is not None:
        tm = max(8, (row_tile // 8) * 8)
    nb = -(-N // tm)            # total number of row tiles
    steps = -(-nb // P)         # tiles per core split
    n_cov = nb * tm             # rows covered by in-bounds tiles

    # Logits stay in native dtype and are NOT padded/copied in HBM; ragged rows
    # are masked in-kernel.  Only pad logits in the degenerate N < tm case.
    out2 = out.reshape(N, V)
    if N < tm:
        out2 = jnp.pad(out2, ((0, tm - N), (0, 0)))
    # y / rewards are tiny: pad so their per-tile blocks never read OOB.
    y2 = y.reshape(N, 1).astype(jnp.int32)
    r2 = rewards.reshape(N, 1).astype(jnp.float32)
    if n_cov != N:
        pad = n_cov - N
        y2 = jnp.pad(y2, ((0, pad), (0, 0)))
        r2 = jnp.pad(r2, ((0, pad), (0, 0)))

    def tile_map(p, i):
        # Clamp to the last in-bounds tile; duplicated tiles are fully masked
        # inside the kernel.
        return (jnp.minimum(p * steps + i, nb - 1), 0)

    cost = pl.CostEstimate(
        flops=6 * N * V,
        transcendentals=N * V,
        bytes_accessed=N * V * itemsize + 2 * N * 4 + P * 4,
    )

    partials = pl.pallas_call(
        functools.partial(_g_loss_kernel, N),
        out_shape=jax.ShapeDtypeStruct((P, 1, 1), jnp.float32),
        grid_spec=pltpu.PrefetchScalarGridSpec(
            num_scalar_prefetch=0,
            grid=(P, steps),
            in_specs=[
                # Logits: one (tm, V) tile per grid step.
                pl.BlockSpec((tm, V), tile_map),
                # y / rewards: matching (tm, 1) tiles, auto-pipelined.
                pl.BlockSpec((tm, 1), tile_map),
                pl.BlockSpec((tm, 1), tile_map),
            ],
            out_specs=pl.BlockSpec((1, 1, 1), lambda p, i: (p, 0, 0)),
            scratch_shapes=[pltpu.VMEM((tm, 1), jnp.float32)],
        ),
        compiler_params=pltpu.CompilerParams(
            dimension_semantics=("parallel", "arbitrary"),
            vmem_limit_bytes=vmem_limit,
        ),
        cost_estimate=cost,
    )(out2, y2, r2)

    # Per-core partial losses summed outside the kernel (P is 1 or 2).
    return jnp.sum(partials)


def g_loss_ref(out, y, rewards):
    """Pure-JAX reference mirroring the PyTorch module."""
    B, T, V = out.shape
    o = out.reshape(-1, V).astype(jnp.float32)
    yy = y.reshape(-1)
    rr = rewards.reshape(-1).astype(jnp.float32)
    log_sm = jax.nn.log_softmax(o, axis=-1)
    log_p_hat = log_sm[jnp.arange(o.shape[0]), yy]
    return jnp.sum(log_p_hat * rr)


if __name__ == "__main__":
    key = jax.random.PRNGKey(0)
    k1, k2, k3, k4, k5, k6 = jax.random.split(key, 6)

    # Case 1: shapes implied by the forward: out (B, T, V), y (B, T), rewards (B, T).
    B, T, V = 2, 8, 32
    out = jax.random.normal(k1, (B, T, V), dtype=jnp.float32)
    y = jax.random.randint(k2, (B, T), 0, V, dtype=jnp.int32)
    rewards = jax.random.uniform(k3, (B, T), dtype=jnp.float32)
    loss = g_loss(out, y, rewards)
    jax.block_until_ready(loss)
    ref = g_loss_ref(out, y, rewards)
    assert jnp.allclose(loss, ref, rtol=1e-5, atol=1e-5), (loss, ref)

    # Case 2: ragged row count (N not a multiple of the row tile) exercises the
    # in-kernel masking path (no HBM-side logits padding).
    B2, T2, V2 = 3, 5, 32
    out_b = jax.random.normal(k4, (B2, T2, V2), dtype=jnp.float32)
    y_b = jax.random.randint(k5, (B2, T2), 0, V2, dtype=jnp.int32)
    rewards_b = jax.random.uniform(k6, (B2, T2), dtype=jnp.float32)
    loss_b = g_loss(out_b, y_b, rewards_b)
    jax.block_until_ready(loss_b)
    ref_b = g_loss_ref(out_b, y_b, rewards_b)
    assert jnp.allclose(loss_b, ref_b, rtol=1e-5, atol=1e-5), (loss_b, ref_b)

    print("KERNEL_OK")
</pallas_src>

<mosaic_0001>
module attributes {stable_mosaic.version = 11 : i64} {
  func.func @_g_loss_kernel(%arg0: i32, %arg1: i32, %arg2: memref<16x32xf32, #tpu.memory_space<vmem>>, %arg3: memref<16x1xi32, #tpu.memory_space<vmem>>, %arg4: memref<16x1xf32, #tpu.memory_space<vmem>>, %arg5: memref<1x1x1xf32, #tpu.memory_space<vmem>>, %arg6: memref<16x1xf32, #tpu.memory_space<vmem>>) attributes {dimension_semantics = [#tpu.dimension_semantics<parallel>, #tpu.dimension_semantics<arbitrary>], iteration_bounds = array<i64: 1, 1>, scalar_prefetch = 0 : i64, scratch_operands = 1 : i64, tpu.core_type = #tpu.core_type<tc>, window_params = [{transform_indices = @transform_0, window_bounds = array<i64: 16, 32>}, {transform_indices = @transform_1, window_bounds = array<i64: 16, 1>}, {transform_indices = @transform_2, window_bounds = array<i64: 16, 1>}, {transform_indices = @transform_3, window_bounds = array<i64: 1, 1, 1>}]} {
    %c0_i32 = arith.constant 0 : i32
    %0 = arith.cmpi eq, %arg1, %c0_i32 : i32
    %1 = arith.extui %0 : i1 to i32
    %c0_i32_0 = arith.constant 0 : i32
    %2 = arith.cmpi ne, %1, %c0_i32_0 : i32
    scf.if %2 {
      %cst_17 = arith.constant 0.000000e+00 : f32
      %39 = vector.broadcast %cst_17 : f32 to vector<16x1xf32>
      %c0_18 = arith.constant 0 : index
      %c0_19 = arith.constant 0 : index
      %40 = vector.load %arg6[%c0_18, %c0_19] : memref<16x1xf32, #tpu.memory_space<vmem>>, vector<16x1xf32>
      tpu.vector_store %arg6[%c0_18, %c0_19], %39 {strides = array<i32>} : memref<16x1xf32, #tpu.memory_space<vmem>>, vector<16x1xf32>,
    } else {
    }
    %c0 = arith.constant 0 : index
    %c0_1 = arith.constant 0 : index
    %3 = vector.load %arg2[%c0, %c0_1] : memref<16x32xf32, #tpu.memory_space<vmem>>, vector<16x32xf32>
    %c0_2 = arith.constant 0 : index
    %c0_3 = arith.constant 0 : index
    %4 = vector.load %arg3[%c0_2, %c0_3] : memref<16x1xi32, #tpu.memory_space<vmem>>, vector<16x1xi32>
    %c0_4 = arith.constant 0 : index
    %c0_5 = arith.constant 0 : index
    %5 = vector.load %arg4[%c0_4, %c0_5] : memref<16x1xf32, #tpu.memory_space<vmem>>, vector<16x1xf32>
    %cst = arith.constant dense<0xFF800000> : vector<16xf32>
    %6 = vector.multi_reduction <maximumf>, %3, %cst [1] : vector<16x32xf32> to vector<16xf32>
    %7 = vector.shape_cast %6 : vector<16xf32> to vector<16x1xf32>
    %8 = vector.broadcast %7 : vector<16x1xf32> to vector<16x32xf32>
    %9 = arith.subf %3, %8 : vector<16x32xf32>
    %10 = math.exp %9 : vector<16x32xf32>
    %cst_6 = arith.constant dense<0.000000e+00> : vector<16xf32>
    %11 = vector.multi_reduction <add>, %10, %cst_6 [1] : vector<16x32xf32> to vector<16xf32>
    %12 = vector.shape_cast %11 : vector<16xf32> to vector<16x1xf32>
    %13 = math.log %12 : vector<16x1xf32>
    %14 = tpu.iota {dimensions = array<i32: 1>} : vector<16x32xi32>
    %15 = vector.broadcast %4 : vector<16x1xi32> to vector<16x32xi32>
    %16 = arith.cmpi eq, %14, %15 : vector<16x32xi32>
    %cst_7 = arith.constant 0.000000e+00 : f32
    %17 = vector.broadcast %cst_7 : f32 to vector<16x32xf32>
    %18 = arith.select %16, %9, %17 : vector<16x32xi1>, vector<16x32xf32>
    %cst_8 = arith.constant dense<0.000000e+00> : vector<16xf32>
    %19 = vector.multi_reduction <add>, %18, %cst_8 [1] : vector<16x32xf32> to vector<16xf32>
    %20 = vector.shape_cast %19 : vector<16xf32> to vector<16x1xf32>
    %21 = arith.subf %20, %13 : vector<16x1xf32>
    %c1_i32 = arith.constant 1 : i32
    %22 = arith.muli %arg0, %c1_i32 : i32
    %23 = arith.addi %22, %arg1 : i32
    %24 = tpu.iota {dimensions = array<i32: 0>} : vector<16x1xi32>
    %c16_i32 = arith.constant 16 : i32
    %25 = arith.muli %23, %c16_i32 : i32
    %26 = vector.broadcast %25 : i32 to vector<16x1xi32>
    %27 = arith.addi %26, %24 : vector<16x1xi32>
    %c16_i32_9 = arith.constant 16 : i32
    %28 = vector.broadcast %c16_i32_9 : i32 to vector<16x1xi32>
    %29 = arith.cmpi slt, %27, %28 : vector<16x1xi32>
    %30 = arith.mulf %21, %5 : vector<16x1xf32>
    %cst_10 = arith.constant 0.000000e+00 : f32
    %31 = vector.broadcast %cst_10 : f32 to vector<16x1xf32>
    %32 = arith.select %29, %30, %31 : vector<16x1xi1>, vector<16x1xf32>
    %c0_11 = arith.constant 0 : index
    %c0_12 = arith.constant 0 : index
    %33 = vector.load %arg6[%c0_11, %c0_12] : memref<16x1xf32, #tpu.memory_space<vmem>>, vector<16x1xf32>
    %34 = arith.addf %33, %32 : vector<16x1xf32>
    %c0_13 = arith.constant 0 : index
    %c0_14 = arith.constant 0 : index
    %35 = vector.load %arg6[%c0_13, %c0_14] : memref<16x1xf32, #tpu.memory_space<vmem>>, vector<16x1xf32>
    tpu.vector_store %arg6[%c0_13, %c0_14], %34 {strides = array<i32>} : memref<16x1xf32, #tpu.memory_space<vmem>>, vector<16x1xf32>,
    %c0_i32_15 = arith.constant 0 : i32
    %36 = arith.cmpi eq, %arg1, %c0_i32_15 : i32
    %37 = arith.extui %36 : i1 to i32
    %c0_i32_16 = arith.constant 0 : i32
    %38 = arith.cmpi ne, %37, %c0_i32_16 : i32
    scf.if %38 {
      %c0_17 = arith.constant 0 : index
      %c0_18 = arith.constant 0 : index
      %39 = vector.load %arg6[%c0_17, %c0_18] : memref<16x1xf32, #tpu.memory_space<vmem>>, vector<16x1xf32>
      %40 = vector.shape_cast %39 : vector<16x1xf32> to vector<1x16x1xf32>
      %cst_19 = arith.constant dense<0.000000e+00> : vector<1xf32>
      %41 = vector.multi_reduction <add>, %40, %cst_19 [1, 2] : vector<1x16x1xf32> to vector<1xf32>
      %42 = vector.shape_cast %41 : vector<1xf32> to vector<1x1x1xf32>
      %43 = vector.extract %42[0, 0, 0] : f32 from vector<1x1x1xf32>
      %44 = vector.broadcast %43 : f32 to vector<1x1x1xf32>
      %c0_20 = arith.constant 0 : index
      %c0_21 = arith.constant 0 : index
      %c0_22 = arith.constant 0 : index
      %45 = vector.load %arg5[%c0_20, %c0_21, %c0_22] : memref<1x1x1xf32, #tpu.memory_space<vmem>>, vector<1x1x1xf32>
      tpu.vector_store %arg5[%c0_20, %c0_21, %c0_22], %44 {strides = array<i32>} : memref<1x1x1xf32, #tpu.memory_space<vmem>>, vector<1x1x1xf32>,
    } else {
    }
    return
  }
  func.func @transform_0(%arg0: i32, %arg1: i32) -> (i32, i32) {
    %c1_i32 = arith.constant 1 : i32
    %0 = arith.muli %arg0, %c1_i32 : i32
    %1 = arith.addi %0, %arg1 : i32
    %c0_i32 = arith.constant 0 : i32
    %2 = arith.minsi %1, %c0_i32 : i32
    %c0_i32_0 = arith.constant 0 : i32
    %c0_i32_1 = arith.constant 0 : i32
    return %2, %c0_i32_0 : i32, i32
  }
  func.func @transform_1(%arg0: i32, %arg1: i32) -> (i32, i32) {
    %c1_i32 = arith.constant 1 : i32
    %0 = arith.muli %arg0, %c1_i32 : i32
    %1 = arith.addi %0, %arg1 : i32
    %c0_i32 = arith.constant 0 : i32
    %2 = arith.minsi %1, %c0_i32 : i32
    %c0_i32_0 = arith.constant 0 : i32
    %c0_i32_1 = arith.constant 0 : i32
    return %2, %c0_i32_0 : i32, i32
  }
  func.func @transform_2(%arg0: i32, %arg1: i32) -> (i32, i32) {
    %c1_i32 = arith.constant 1 : i32
    %0 = arith.muli %arg0, %c1_i32 : i32
    %1 = arith.addi %0, %arg1 : i32
    %c0_i32 = arith.constant 0 : i32
    %2 = arith.minsi %1, %c0_i32 : i32
    %c0_i32_0 = arith.constant 0 : i32
    %c0_i32_1 = arith.constant 0 : i32
    return %2, %c0_i32_0 : i32, i32
  }
  func.func @transform_3(%arg0: i32, %arg1: i32) -> (i32, i32, i32) {
    %c0_i32 = arith.constant 0 : i32
    %c0_i32_0 = arith.constant 0 : i32
    %c0_i32_1 = arith.constant 0 : i32
    return %arg0, %c0_i32, %c0_i32_0 : i32, i32, i32
  }
}

</mosaic_0001>

<llo_original>
// kernel: tpu_custom_call.1
$region0: #{tpu_custom_call.1}
  #allocation0 [shape = 'u32[]', space=smem, size = 0x4, offset = 0x4, fixed_abs, tag = 'smem constant byte address 0x4 - core index']
  #allocation1 [shape = 'u32[144,128]{1,0:T(1,128)}', space=vmem, size = 0x12000, scoped, tag = 'internal scratch']
  #allocation2 [shape = 'f32[16,1]{1,0:T(8,128)}', space=vmem, size = 0x2000, scoped, tag = 'scratch operand']
  %s0 = inlined_call_operand.vmem [shape: f32[16,32], index: 0, kind: input, shape index: {}]
  %s1 = inlined_call_operand.vmem [shape: s32[16,1], index: 1, kind: input, shape index: {}]
  %s2 = inlined_call_operand.vmem [shape: f32[16,1], index: 2, kind: input, shape index: {}]
  %s3 = inlined_call_operand.hbm [shape: f32[1,1,1], index: 3, kind: output, shape index: {}]
  %s4 = sld [smem:[#allocation0]]
  $region30: #{tpu_custom_call.1} parent=0
    _
  %s6 = ssub.s32 1, %s4
  %s7 = scalar_select 0, %s6, %s4
  $region1: #{tpu_custom_call.1} parent=0
    #allocation3 [shape = 'u8[512]{0}', space=vmem, size = 0x400, scoped, tag = 'output window, operand 0, single buffered']
    #allocation4 [shape = 's32[1]{0}', space=sflag, size = 0x4, scoped, tag = 'scoped memory for tpu_custom_call.1']
    %8 = vsyncpa [#allocation4], 0
    // Predicated region
    $region2: #{tpu_custom_call.1} parent=1 // pred_check
      _
    $region3: #{tpu_custom_call.1} parent=1 // pred_check_branch
      %10 = sbr.rel (0) target = $region5
    $region4: #{tpu_custom_call.1} parent=1 // pred_region
      %s11 = sadd.s32 0, 0
      %p12 = scmp.lt.s32.totalorder %s11, 0
      %s13 = scalar_select %p12, %s11, 0
      %s14 = smul.u32 2, %s13
      %p15 = scmp.lt.s32.totalorder %s14, 1
      %s16 = scalar_select %p15, %s14, 1
      %s17 = smul.addr %s16, 8
      %s18 = scalar_lea.vmem %s0, %s17
      %s19 = sadd.s32 0, 0
      %p20 = scmp.lt.s32.totalorder %s19, 0
      %s21 = scalar_select %p20, %s19, 0
      %s22 = smul.u32 2, %s21
    $region5: #{tpu_custom_call.1} parent=1 // pred_fallthru
      _
    // Predicated region
    $region6: #{tpu_custom_call.1} parent=1 // pred_check
      _
    $region7: #{tpu_custom_call.1} parent=1 // pred_check_branch
      %24 = sbr.rel (0) target = $region9
    $region8: #{tpu_custom_call.1} parent=1 // pred_region
      %s25 = sadd.s32 0, 0
      %p26 = scmp.lt.s32.totalorder %s25, 0
      %s27 = scalar_select %p26, %s25, 0
      %s28 = smul.u32 2, %s27
      %p29 = scmp.lt.s32.totalorder %s28, 1
      %s30 = scalar_select %p29, %s28, 1
      %s31 = smul.addr %s30, 8
      %s32 = scalar_lea.vmem %s1, %s31
      %s33 = sadd.s32 0, 0
      %p34 = scmp.lt.s32.totalorder %s33, 0
      %s35 = scalar_select %p34, %s33, 0
      %s36 = smul.u32 2, %s35
    $region9: #{tpu_custom_call.1} parent=1 // pred_fallthru
      _
    // Predicated region
    $region10: #{tpu_custom_call.1} parent=1 // pred_check
      _
    $region11: #{tpu_custom_call.1} parent=1 // pred_check_branch
      %38 = sbr.rel (0) target = $region13
    $region12: #{tpu_custom_call.1} parent=1 // pred_region
      %s39 = sadd.s32 0, 0
      %p40 = scmp.lt.s32.totalorder %s39, 0
      %s41 = scalar_select %p40, %s39, 0
      %s42 = smul.u32 2, %s41
      %p43 = scmp.lt.s32.totalorder %s42, 1
      %s44 = scalar_select %p43, %s42, 1
      %s45 = smul.addr %s44, 8
      %s46 = scalar_lea.vmem %s2, %s45
      %s47 = sadd.s32 0, 0
      %p48 = scmp.lt.s32.totalorder %s47, 0
      %s49 = scalar_select %p48, %s47, 0
      %s50 = smul.u32 2, %s49
    $region13: #{tpu_custom_call.1} parent=1 // pred_fallthru
      _
    %s51 = sadd.s32 0, 0
    %p52 = scmp.lt.s32.totalorder %s51, 0
    %s53 = scalar_select %p52, %s51, 0
    %s54 = smul.u32 2, %s53
    %p55 = scmp.lt.s32.totalorder %s54, 1
    %s56 = scalar_select %p55, %s54, 1
    %s57 = smul.addr %s56, 8
    %s58 = scalar_lea.vmem %s0, %s57
    %s59 = sadd.s32 0, 0
    %p60 = scmp.lt.s32.totalorder %s59, 0
    %s61 = scalar_select %p60, %s59, 0
    %s62 = smul.u32 2, %s61
    %p63 = scmp.lt.s32.totalorder %s62, 1
    %s64 = scalar_select %p63, %s62, 1
    %s65 = smul.addr %s64, 8
    %s66 = scalar_lea.vmem %s1, %s65
    %s67 = sadd.s32 0, 0
    %p68 = scmp.lt.s32.totalorder %s67, 0
    %s69 = scalar_select %p68, %s67, 0
    %s70 = smul.u32 2, %s69
    %p71 = scmp.lt.s32.totalorder %s70, 1
    %s72 = scalar_select %p71, %s70, 1
    %s73 = smul.addr %s72, 8
    %s74 = scalar_lea.vmem %s2, %s73
    %s75 = sadd.s32 0, 0
    %p76 = scmp.lt.s32.totalorder %s75, 0
    %s77 = scalar_select %p76, %s75, 0
    %s78 = smul.u32 2, %s77
    %p79 = scmp.lt.s32.totalorder %s78, 1
    %s80 = scalar_select %p79, %s78, 1
    %s81 = smul.addr %s80, 8
    %s82 = scalar_lea.vmem %s0, %s81
    %s83 = sadd.s32 0, 0
    %p84 = scmp.lt.s32.totalorder %s83, 0
    %s85 = scalar_select %p84, %s83, 0
    %s86 = smul.u32 2, %s85
    %s87 = sadd.s32 0, 0
    %p88 = scmp.lt.s32.totalorder %s87, 0
    %s89 = scalar_select %p88, %s87, 0
    %s90 = smul.u32 2, %s89
    %p91 = scmp.lt.s32.totalorder %s90, 1
    %s92 = scalar_select %p91, %s90, 1
    %s93 = smul.addr %s92, 8
    %s94 = scalar_lea.vmem %s1, %s93
    %s95 = sadd.s32 0, 0
    %p96 = scmp.lt.s32.totalorder %s95, 0
    %s97 = scalar_select %p96, %s95, 0
    %s98 = smul.u32 2, %s97
    %s99 = sadd.s32 0, 0
    %p100 = scmp.lt.s32.totalorder %s99, 0
    %s101 = scalar_select %p100, %s99, 0
    %s102 = smul.u32 2, %s101
    %p103 = scmp.lt.s32.totalorder %s102, 1
    %s104 = scalar_select %p103, %s102, 1
    %s105 = smul.addr %s104, 8
    %s106 = scalar_lea.vmem %s2, %s105
    %s107 = sadd.s32 0, 0
    %p108 = scmp.lt.s32.totalorder %s107, 0
    %s109 = scalar_select %p108, %s107, 0
    %s110 = smul.u32 2, %s109
    %p111 = scmp.eq.s32.totalorder 0, 0
    // Predicated region
    $region14: #{tpu_custom_call.1} parent=1 // pred_check
      %p112 = pneg %p111
    $region15: #{tpu_custom_call.1} parent=1 // pred_check_branch
      %114 = sbr.rel (%p112) target = $region17
    $region16: #{tpu_custom_call.1} parent=1 // pred_region
      %vm115 = vcmask 7168
      %116 = vst.msk [vmem:[#allocation2] sm:$0xff] %vm115, 0.0
      %117 = vst.msk [vmem:[#allocation2 + $0x8] sm:$0xff] %vm115, 0.0
    $region17: #{tpu_custom_call.1} parent=1 // pred_fallthru
      _
    %v118 = vld [vmem:[%s82] sm:$0xff]
    %v119 = vld [vmem:[%s82 + $0x8] sm:$0xff]
    %v120 = vld [vmem:[%s94] sm:$0xff]
    %v121 = vld [vmem:[%s94 + $0x8] sm:$0xff]
    %v122 = vld [vmem:[%s106] sm:$0xff]
    %v123 = vld [vmem:[%s106 + $0x8] sm:$0xff]
    %vm124 = vcmask 261120
    %v125 = vsel %vm124, %v118, -inf
    %126 = vmax.xlane.f32.xlu0 %v125
    %v127 = vpop.xlane.xlu0 %126
    %v128 = vsel %vm124, %v119, -inf
    %129 = vmax.xlane.f32.xlu0 %v128
    %v130 = vpop.xlane.xlu0 %129
    %v131 = vsub.f32 %v118, %v127
    %v132 = vsub.f32 %v119, %v130
    %v133 = vmul.f32 %v131, 1.442695
    %v134 = vpow.pop %v133
    %v135 = vmul.f32 %v132, 1.442695
    %v136 = vpow.pop %v135
    %v137 = vsel %vm124, %v134, 0.0
    %138 = vadd.xlane.f32.xlu0 %v137
    %v139 = vpop.xlane.xlu0 %138
    %v140 = vsel %vm124, %v136, 0.0
    %141 = vadd.xlane.f32.xlu0 %v140
    %v142 = vpop.xlane.xlu0 %141
    %v143 = vlog2.pop %v139
    %v144 = vmul.f32 %v143, 0.6931472
    %v145 = vlog2.pop %v142
    %v146 = vmul.f32 %v145, 0.6931472
    %v147 = vlaneseq
    %v148 = vand.u32 %v147, 127
    %149 = vset.pattern.permute.xlu0 0
    %150 = vperm.xlu0 %149, %v120
    %v151 = vpop.permute.xlu0 %150
    %152 = vset.pattern.permute.xlu0 0
    %153 = vperm.xlu0 %152, %v121
    %v154 = vpop.permute.xlu0 %153
    %vm155 = vcmp.eq.s32.totalorder %v148, %v151
    %vm156 = vcmp.eq.s32.totalorder %v148, %v154
    %v157 = vsel %vm155, %v131, 0.0
    %v158 = vsel %vm156, %v132, 0.0
    %v159 = vsel %vm124, %v157, 0.0
    %160 = vadd.xlane.f32.xlu0 %v159
    %v161 = vpop.xlane.xlu0 %160
    %v162 = vsel %vm124, %v158, 0.0
    %163 = vadd.xlane.f32.xlu0 %v162
    %v164 = vpop.xlane.xlu0 %163
    %v165 = vsub.f32 %v161, %v144
    %v166 = vsub.f32 %v164, %v146
    %s167 = sadd.s32 0, 0
    %v168 = vlaneseq
    %v169 = vshrl.u32 %v168, 7
    %v170 = vadd.s32 %v169, 8
    %s171 = smul.u32 %s167, 16
    %v172 = vstv %s171
    %v173 = vadd.s32 %v172, %v169
    %v174 = vadd.s32 %v172, %v170
    %vm175 = vcmp.lt.s32.totalorder %v173, 16
    %vm176 = vcmp.lt.s32.totalorder %v174, 16
    %v177 = vmul.f32 %v165, %v122
    %v178 = vmul.f32 %v166, %v123
    %v179 = vsel %vm175, %v177, 0.0
    %v180 = vsel %vm176, %v178, 0.0
    %v181 = vld [vmem:[#allocation2] sm:$0xff]
    %v182 = vld [vmem:[#allocation2 + $0x8] sm:$0xff]
    %v183 = vadd.f32 %v181, %v179
    %v184 = vadd.f32 %v182, %v180
    %vm185 = vcmask 7168
    %186 = vst.msk [vmem:[#allocation2] sm:$0xff] %vm185, %v183
    %187 = vst.msk [vmem:[#allocation2 + $0x8] sm:$0xff] %vm185, %v184
    // Predicated region
    $region18: #{tpu_custom_call.1} parent=1 // pred_check
      %p188 = pneg %p111
    $region19: #{tpu_custom_call.1} parent=1 // pred_check_branch
      %190 = sbr.rel (%p188) target = $region21
    $region20: #{tpu_custom_call.1} parent=1 // pred_region
      %v191 = vld [vmem:[#allocation2] sm:$0xff]
      %v192 = vld [vmem:[#allocation2 + $0x8] sm:$0xff]
      %v193 = vsel %vm185, %v191, 0.0
      %v194 = vsel %vm185, %v192, 0.0
      %v195 = vadd.f32 %v193, %v194
      %196 = vadd.xlane.f32.xlu0 %v195
      %v197 = vpop.xlane.xlu0 %196
      %v198 = vrot.slane %v197, 4
      %v199 = vadd.f32 %v197, %v198
      %v200 = vrot.slane %v199, 2
      %v201 = vadd.f32 %v199, %v200
      %v202 = vrot.slane %v201, 1
      %v203 = vadd.f32 %v201, %v202
      %s204 = vtos %v203
      %v205 = vstv %s204
      %vm206 = vcmask 0
      %207 = vst.msk [vmem:[#allocation3] sm:$0x1] %vm206, %v205
    $region21: #{tpu_custom_call.1} parent=1 // pred_fallthru
      _
    // Predicated region
    $region22: #{tpu_custom_call.1} parent=1 // pred_check
      _
    $region23: #{tpu_custom_call.1} parent=1 // pred_check_branch
      %209 = sbr.rel (0) target = $region25
    $region24: #{tpu_custom_call.1} parent=1 // pred_region
      %s211 = ssub.s32 16, 16
      %212 = vsyncadd [#allocation4], %s211
      %s214 = sshll.u32 [#allocation3], 4
      %s215 = int_to_ptr.vmem [resolvable:$true] %s214
      %217 = dma.vmem_to_hbm [thread:$0]  %s215, 16, %s3, [#allocation4]
    $region25: #{tpu_custom_call.1} parent=1 // pred_fallthru
      _
    // Predicated region
    $region26: #{tpu_custom_call.1} parent=1 // pred_check
      _
    $region27: #{tpu_custom_call.1} parent=1 // pred_check_branch
      %219 = sbr.rel (0) target = $region29
    $region28: #{tpu_custom_call.1} parent=1 // pred_region
      %220 = dma.done [#allocation4], 16
    $region29: #{tpu_custom_call.1} parent=1 // pred_fallthru
      _
    %221 = vsyncpa [#allocation4], 1

</llo_original>
